<compile_context>
chip_gen: v6e
topology: v6e:2x2x1
jax: 0.10.0
libtpu: 0.0.40
codegen_flags: <defaults>
</compile_context>

<pallas_src>
import functools

import jax
import jax.numpy as jnp
from jax.experimental import pallas as pl
from jax.experimental.pallas import tpu as pltpu

LANES = 128
_TARGET_TILE_BYTES = 2 * 1024 * 1024  # ~2 MiB per x buffer (mem-bound sweet spot)


def _choose_tiles(B, C, L, itemsize):
    """Pick (tile_b, tile_l) so one padded x block is ~<= 2 MiB of VMEM."""
    # Sublane packing granularity depends on dtype width.
    sub = 8 if itemsize >= 4 else (16 if itemsize == 2 else 32)
    c_pad = ((C + sub - 1) // sub) * sub
    col_bytes = c_pad * itemsize                       # one L position, padded rows
    if B * col_bytes * L <= _TARGET_TILE_BYTES:
        return B, L                                    # whole array in one block
    tl = (_TARGET_TILE_BYTES // (B * col_bytes)) // LANES * LANES
    if tl >= LANES:
        return B, int(tl)                              # tile over L only
    # Batch*channels alone exceeds the budget: tile over batch as well.
    tl = LANES if L >= LANES else L
    tb = max(1, _TARGET_TILE_BYTES // (col_bytes * tl))
    return int(min(tb, B)), int(tl)


def _pool_gate_kernel(x_ref, w1_ref, b1_ref, alpha_ref, w2_ref, b2_ref,
                      s_ref, acc_ref, *, length, tile_l, mask_tail):
    """Accumulate sum over L; on the last L step compute the SE gate."""
    l = pl.program_id(1)

    @pl.when(l == 0)
    def _init():
        acc_ref[...] = jnp.zeros_like(acc_ref)

    xb = x_ref[...].astype(jnp.float32)                      # (tb, C, tile_l)
    if mask_tail:
        # Mask the ragged tail tile in-kernel (no host-side padding of x).
        col = jax.lax.broadcasted_iota(jnp.int32, xb.shape, 2) + l * tile_l
        xb = jnp.where(col < length, xb, 0.0)
    acc_ref[...] += jnp.sum(xb, axis=-1, keepdims=True)      # (tb, C, 1)

    @pl.when(l == pl.num_programs(1) - 1)
    def _finalize():
        # adaptive_avg_pool1d(x, 1): mean over L.
        se = acc_ref[...] / jnp.float32(length)               # (tb, C, 1)
        # conv1 (1x1): h[b, m] = sum_c w1[m, c] * se[b, c] + b1[m]
        # w1_ref is pre-laid-out as (1, C, C_mid) == w1.T[None].
        h = jnp.sum(se * w1_ref[...], axis=1, keepdims=True) + b1_ref[...]
        # PReLU with a single shared alpha (nn.PReLU() default).
        alpha = alpha_ref[...]                                # (1, 1, 1)
        h = jnp.where(h > 0.0, h, alpha * h)                  # (tb, 1, C_mid)
        # conv2 (1x1): g[b, c] = sum_m w2[c, m] * h[b, m] + b2[c]
        # w2_ref is (1, C, C_mid) == w2[None].
        g = jnp.sum(h * w2_ref[...], axis=-1, keepdims=True) + b2_ref[...]
        s_ref[...] = jax.nn.sigmoid(g)                        # (tb, C, 1)


def _add_kernel(x_ref, s_ref, o_ref):
    o_ref[...] = (x_ref[...].astype(jnp.float32) + s_ref[...]).astype(o_ref.dtype)


def se_block_forward(x, w1, b1, alpha, w2, b2, *, tile_b=None, tile_l=None):
    """Pallas forward of se_block.

    x:  (B, C, L)  input (native dtype; math in f32 inside the kernels)
    w1: (C_mid, C) conv1 weight (kernel_size=1), b1: (C_mid,)
    w2: (C, C_mid) conv2 weight (kernel_size=1), b2: (C,)
    alpha: scalar (or shape-(1,)) PReLU parameter.
    tile_b / tile_l: optional tiling overrides (testing / tuning).
    """
    B, C, L = x.shape
    C_mid = w1.shape[0]
    f32 = jnp.float32
    itemsize = x.dtype.itemsize

    tb_auto, tl_auto = _choose_tiles(B, C, L, itemsize)
    tb = int(tile_b) if tile_b is not None else tb_auto
    tl = int(tile_l) if tile_l is not None else tl_auto
    num_b = int(pl.cdiv(B, tb))
    num_l = int(pl.cdiv(L, tl))
    mask_tail = (L % tl) != 0

    # Pre-lay-out the (tiny) parameters so the kernels need no reshapes.
    w1_r = jnp.asarray(w1, f32).T.reshape(1, C, C_mid)     # [1, c, m] = w1[m, c]
    b1_r = jnp.asarray(b1, f32).reshape(1, 1, C_mid)
    w2_r = jnp.asarray(w2, f32).reshape(1, C, C_mid)       # [1, c, m] = w2[c, m]
    b2_r = jnp.asarray(b2, f32).reshape(1, C, 1)
    alpha_r = jnp.asarray(alpha, f32).reshape(1, 1, 1)

    # --- Pass 1: pooling + SE gate (sequential reduction over L tiles) ---
    s = pl.pallas_call(
        functools.partial(_pool_gate_kernel, length=L, tile_l=tl,
                          mask_tail=mask_tail),
        out_shape=jax.ShapeDtypeStruct((B, C, 1), f32),
        grid_spec=pltpu.PrefetchScalarGridSpec(
            num_scalar_prefetch=0,
            grid=(num_b, num_l),
            in_specs=[
                pl.BlockSpec((tb, C, tl), lambda b, l: (b, 0, l)),
                pl.BlockSpec((1, C, C_mid), lambda b, l: (0, 0, 0)),
                pl.BlockSpec((1, 1, C_mid), lambda b, l: (0, 0, 0)),
                pl.BlockSpec((1, 1, 1), lambda b, l: (0, 0, 0)),
                pl.BlockSpec((1, C, C_mid), lambda b, l: (0, 0, 0)),
                pl.BlockSpec((1, C, 1), lambda b, l: (0, 0, 0)),
            ],
            out_specs=pl.BlockSpec((tb, C, 1), lambda b, l: (b, 0, 0)),
            scratch_shapes=[pltpu.VMEM((tb, C, 1), f32)],
        ),
        compiler_params=pltpu.CompilerParams(
            dimension_semantics=("parallel", "arbitrary"),
        ),
        cost_estimate=pl.CostEstimate(
            flops=B * C * L + 4 * B * C * C_mid,
            transcendentals=B * C,
            bytes_accessed=B * C * L * itemsize + B * C * 4,
        ),
    )(x, w1_r, b1_r, alpha_r, w2_r, b2_r)

    # --- Pass 2: broadcast add (fully parallel; 2 TCs on v7x) ---
    out = pl.pallas_call(
        _add_kernel,
        out_shape=jax.ShapeDtypeStruct((B, C, L), x.dtype),
        grid_spec=pltpu.PrefetchScalarGridSpec(
            num_scalar_prefetch=0,
            grid=(num_b, num_l),
            in_specs=[
                pl.BlockSpec((tb, C, tl), lambda b, l: (b, 0, l)),
                pl.BlockSpec((tb, C, 1), lambda b, l: (b, 0, 0)),
            ],
            out_specs=pl.BlockSpec((tb, C, tl), lambda b, l: (b, 0, l)),
        ),
        compiler_params=pltpu.CompilerParams(
            dimension_semantics=("parallel", "parallel"),
        ),
        cost_estimate=pl.CostEstimate(
            flops=B * C * L,
            transcendentals=0,
            bytes_accessed=2 * B * C * L * itemsize + B * C * 4,
        ),
    )(x, s)
    return out


def se_block_ref(x, w1, b1, alpha, w2, b2):
    """Pure-JAX reference matching the PyTorch se_block.forward."""
    xf = x.astype(jnp.float32)
    se = jnp.mean(xf, axis=-1)                                   # (B, C)
    h = se @ jnp.asarray(w1, jnp.float32).T + jnp.asarray(b1, jnp.float32)
    h = jnp.where(h > 0, h, jnp.float32(alpha) * h)              # PReLU
    g = jax.nn.sigmoid(
        h @ jnp.asarray(w2, jnp.float32).T + jnp.asarray(b2, jnp.float32)
    )                                                            # (B, C)
    return (xf + g[:, :, None]).astype(x.dtype)


if __name__ == "__main__":
    key = jax.random.PRNGKey(0)
    kx, k1, kb1, k2, kb2, kx2 = jax.random.split(key, 6)

    # se_block(in_layer=4, out_layer=32): conv1: 4 -> 4 channels, conv2: 4 -> 4.
    B, C, L = 2, 4, 16
    out_layer = 32
    C_mid = out_layer // 8

    x = jax.random.normal(kx, (B, C, L), jnp.float32)
    w1 = jax.random.normal(k1, (C_mid, C), jnp.float32) * 0.5   # conv1 (1x1) weight
    b1 = jax.random.normal(kb1, (C_mid,), jnp.float32) * 0.1
    w2 = jax.random.normal(k2, (C, C_mid), jnp.float32) * 0.5   # conv2 (1x1) weight
    b2 = jax.random.normal(kb2, (C,), jnp.float32) * 0.1
    alpha = jnp.float32(0.25)                                   # nn.PReLU() default init

    # Test 1: whole array in one block (the typical small-shape path).
    out = jax.block_until_ready(se_block_forward(x, w1, b1, alpha, w2, b2))
    ref = jax.block_until_ready(se_block_ref(x, w1, b1, alpha, w2, b2))
    assert out.shape == (B, C, L), out.shape
    assert jnp.allclose(out, ref, atol=1e-5, rtol=1e-5), (out, ref)

    # Test 2: exercise the tiled-L path with a ragged tail (tile_l override).
    L2 = 300
    x2 = jax.random.normal(kx2, (B, C, L2), jnp.float32)
    out2 = jax.block_until_ready(
        se_block_forward(x2, w1, b1, alpha, w2, b2, tile_l=128))
    ref2 = jax.block_until_ready(se_block_ref(x2, w1, b1, alpha, w2, b2))
    assert out2.shape == (B, C, L2), out2.shape
    assert jnp.allclose(out2, ref2, atol=1e-5, rtol=1e-5), (out2, ref2)

    print("KERNEL_OK")
</pallas_src>

<mosaic_0001>
module attributes {stable_mosaic.version = 11 : i64} {
  func.func @_pool_gate_kernel(%arg0: i32, %arg1: i32, %arg2: memref<2x4x16xf32, #tpu.memory_space<vmem>>, %arg3: memref<1x4x4xf32, #tpu.memory_space<vmem>>, %arg4: memref<1x1x4xf32, #tpu.memory_space<vmem>>, %arg5: memref<1x1x1xf32, #tpu.memory_space<vmem>>, %arg6: memref<1x4x4xf32, #tpu.memory_space<vmem>>, %arg7: memref<1x4x1xf32, #tpu.memory_space<vmem>>, %arg8: memref<2x4x1xf32, #tpu.memory_space<vmem>>, %arg9: memref<2x4x1xf32, #tpu.memory_space<vmem>>) attributes {dimension_semantics = [#tpu.dimension_semantics<parallel>, #tpu.dimension_semantics<arbitrary>], iteration_bounds = array<i64: 1, 1>, scalar_prefetch = 0 : i64, scratch_operands = 1 : i64, tpu.core_type = #tpu.core_type<tc>, window_params = [{transform_indices = @transform_0, window_bounds = array<i64: 2, 4, 16>}, {pipeline_mode = #tpu.pipeline_mode<synchronous>, transform_indices = @transform_1, window_bounds = array<i64: 1, 4, 4>}, {pipeline_mode = #tpu.pipeline_mode<synchronous>, transform_indices = @transform_2, window_bounds = array<i64: 1, 1, 4>}, {pipeline_mode = #tpu.pipeline_mode<synchronous>, transform_indices = @transform_3, window_bounds = array<i64: 1, 1, 1>}, {pipeline_mode = #tpu.pipeline_mode<synchronous>, transform_indices = @transform_4, window_bounds = array<i64: 1, 4, 4>}, {pipeline_mode = #tpu.pipeline_mode<synchronous>, transform_indices = @transform_5, window_bounds = array<i64: 1, 4, 1>}, {transform_indices = @transform_6, window_bounds = array<i64: 2, 4, 1>}]} {
    %c0_i32 = arith.constant 0 : i32
    %0 = arith.cmpi eq, %arg1, %c0_i32 : i32
    %1 = arith.extui %0 : i1 to i32
    %c0_i32_0 = arith.constant 0 : i32
    %2 = arith.cmpi ne, %1, %c0_i32_0 : i32
    scf.if %2 {
      %cst_11 = arith.constant 0.000000e+00 : f32
      %12 = vector.broadcast %cst_11 : f32 to vector<2x4x1xf32>
      %c0_12 = arith.constant 0 : index
      %c0_13 = arith.constant 0 : index
      %c0_14 = arith.constant 0 : index
      %13 = vector.load %arg9[%c0_12, %c0_13, %c0_14] : memref<2x4x1xf32, #tpu.memory_space<vmem>>, vector<2x4x1xf32>
      tpu.vector_store %arg9[%c0_12, %c0_13, %c0_14], %12 {strides = array<i32>} : memref<2x4x1xf32, #tpu.memory_space<vmem>>, vector<2x4x1xf32>,
    } else {
    }
    %c0 = arith.constant 0 : index
    %c0_1 = arith.constant 0 : index
    %c0_2 = arith.constant 0 : index
    %3 = vector.load %arg2[%c0, %c0_1, %c0_2] : memref<2x4x16xf32, #tpu.memory_space<vmem>>, vector<2x4x16xf32>
    %c0_3 = arith.constant 0 : index
    %c0_4 = arith.constant 0 : index
    %c0_5 = arith.constant 0 : index
    %4 = vector.load %arg9[%c0_3, %c0_4, %c0_5] : memref<2x4x1xf32, #tpu.memory_space<vmem>>, vector<2x4x1xf32>
    %cst = arith.constant dense<0.000000e+00> : vector<2x4xf32>
    %5 = vector.multi_reduction <add>, %3, %cst [2] : vector<2x4x16xf32> to vector<2x4xf32>
    %6 = vector.shape_cast %5 : vector<2x4xf32> to vector<2x4x1xf32>
    %7 = arith.addf %4, %6 : vector<2x4x1xf32>
    %c0_6 = arith.constant 0 : index
    %c0_7 = arith.constant 0 : index
    %c0_8 = arith.constant 0 : index
    %8 = vector.load %arg9[%c0_6, %c0_7, %c0_8] : memref<2x4x1xf32, #tpu.memory_space<vmem>>, vector<2x4x1xf32>
    tpu.vector_store %arg9[%c0_6, %c0_7, %c0_8], %7 {strides = array<i32>} : memref<2x4x1xf32, #tpu.memory_space<vmem>>, vector<2x4x1xf32>,
    %c0_i32_9 = arith.constant 0 : i32
    %9 = arith.cmpi eq, %arg1, %c0_i32_9 : i32
    %10 = arith.extui %9 : i1 to i32
    %c0_i32_10 = arith.constant 0 : i32
    %11 = arith.cmpi ne, %10, %c0_i32_10 : i32
    scf.if %11 {
      %c0_11 = arith.constant 0 : index
      %c0_12 = arith.constant 0 : index
      %c0_13 = arith.constant 0 : index
      %12 = vector.load %arg9[%c0_11, %c0_12, %c0_13] : memref<2x4x1xf32, #tpu.memory_space<vmem>>, vector<2x4x1xf32>
      %cst_14 = arith.constant 1.600000e+01 : f32
      %13 = vector.broadcast %cst_14 : f32 to vector<2x4x1xf32>
      %14 = arith.divf %12, %13 : vector<2x4x1xf32>
      %c0_15 = arith.constant 0 : index
      %c0_16 = arith.constant 0 : index
      %c0_17 = arith.constant 0 : index
      %15 = vector.load %arg3[%c0_15, %c0_16, %c0_17] : memref<1x4x4xf32, #tpu.memory_space<vmem>>, vector<1x4x4xf32>
      %16 = vector.broadcast %14 : vector<2x4x1xf32> to vector<2x4x4xf32>
      %17 = vector.broadcast %15 : vector<1x4x4xf32> to vector<2x4x4xf32>
      %18 = arith.mulf %16, %17 : vector<2x4x4xf32>
      %cst_18 = arith.constant dense<0.000000e+00> : vector<2x4xf32>
      %19 = vector.multi_reduction <add>, %18, %cst_18 [1] : vector<2x4x4xf32> to vector<2x4xf32>
      %20 = vector.shape_cast %19 : vector<2x4xf32> to vector<2x1x4xf32>
      %c0_19 = arith.constant 0 : index
      %c0_20 = arith.constant 0 : index
      %c0_21 = arith.constant 0 : index
      %21 = vector.load %arg4[%c0_19, %c0_20, %c0_21] : memref<1x1x4xf32, #tpu.memory_space<vmem>>, vector<1x1x4xf32>
      %22 = vector.broadcast %21 : vector<1x1x4xf32> to vector<2x1x4xf32>
      %23 = arith.addf %20, %22 : vector<2x1x4xf32>
      %c0_22 = arith.constant 0 : index
      %c0_23 = arith.constant 0 : index
      %c0_24 = arith.constant 0 : index
      %24 = vector.load %arg5[%c0_22, %c0_23, %c0_24] : memref<1x1x1xf32, #tpu.memory_space<vmem>>, vector<1x1x1xf32>
      %cst_25 = arith.constant 0.000000e+00 : f32
      %25 = vector.broadcast %cst_25 : f32 to vector<2x1x4xf32>
      %26 = arith.cmpf ogt, %23, %25 : vector<2x1x4xf32>
      %27 = vector.broadcast %24 : vector<1x1x1xf32> to vector<2x1x4xf32>
      %28 = arith.mulf %27, %23 : vector<2x1x4xf32>
      %29 = arith.select %26, %23, %28 : vector<2x1x4xi1>, vector<2x1x4xf32>
      %c0_26 = arith.constant 0 : index
      %c0_27 = arith.constant 0 : index
      %c0_28 = arith.constant 0 : index
      %30 = vector.load %arg6[%c0_26, %c0_27, %c0_28] : memref<1x4x4xf32, #tpu.memory_space<vmem>>, vector<1x4x4xf32>
      %31 = vector.broadcast %29 : vector<2x1x4xf32> to vector<2x4x4xf32>
      %32 = vector.broadcast %30 : vector<1x4x4xf32> to vector<2x4x4xf32>
      %33 = arith.mulf %31, %32 : vector<2x4x4xf32>
      %cst_29 = arith.constant dense<0.000000e+00> : vector<2x4xf32>
      %34 = vector.multi_reduction <add>, %33, %cst_29 [2] : vector<2x4x4xf32> to vector<2x4xf32>
      %35 = vector.shape_cast %34 : vector<2x4xf32> to vector<2x4x1xf32>
      %c0_30 = arith.constant 0 : index
      %c0_31 = arith.constant 0 : index
      %c0_32 = arith.constant 0 : index
      %36 = vector.load %arg7[%c0_30, %c0_31, %c0_32] : memref<1x4x1xf32, #tpu.memory_space<vmem>>, vector<1x4x1xf32>
      %37 = vector.broadcast %36 : vector<1x4x1xf32> to vector<2x4x1xf32>
      %38 = arith.addf %35, %37 : vector<2x4x1xf32>
      %39 = arith.negf %38 : vector<2x4x1xf32>
      %40 = math.exp %39 : vector<2x4x1xf32>
      %cst_33 = arith.constant 1.000000e+00 : f32
      %41 = vector.broadcast %cst_33 : f32 to vector<2x4x1xf32>
      %42 = arith.addf %41, %40 : vector<2x4x1xf32>
      %43 = arith.divf %41, %42 : vector<2x4x1xf32>
      %c0_34 = arith.constant 0 : index
      %c0_35 = arith.constant 0 : index
      %c0_36 = arith.constant 0 : index
      %44 = vector.load %arg8[%c0_34, %c0_35, %c0_36] : memref<2x4x1xf32, #tpu.memory_space<vmem>>, vector<2x4x1xf32>
      tpu.vector_store %arg8[%c0_34, %c0_35, %c0_36], %43 {strides = array<i32>} : memref<2x4x1xf32, #tpu.memory_space<vmem>>, vector<2x4x1xf32>,
    } else {
    }
    return
  }
  func.func @transform_0(%arg0: i32, %arg1: i32) -> (i32, i32, i32) {
    %c0_i32 = arith.constant 0 : i32
    %c0_i32_0 = arith.constant 0 : i32
    return %arg0, %c0_i32, %arg1 : i32, i32, i32
  }
  func.func @transform_1(%arg0: i32, %arg1: i32) -> (i32, i32, i32) {
    %c0_i32 = arith.constant 0 : i32
    %c0_i32_0 = arith.constant 0 : i32
    %c0_i32_1 = arith.constant 0 : i32
    %c0_i32_2 = arith.constant 0 : i32
    return %c0_i32, %c0_i32_0, %c0_i32_1 : i32, i32, i32
  }
  func.func @transform_2(%arg0: i32, %arg1: i32) -> (i32, i32, i32) {
    %c0_i32 = arith.constant 0 : i32
    %c0_i32_0 = arith.constant 0 : i32
    %c0_i32_1 = arith.constant 0 : i32
    %c0_i32_2 = arith.constant 0 : i32
    return %c0_i32, %c0_i32_0, %c0_i32_1 : i32, i32, i32
  }
  func.func @transform_3(%arg0: i32, %arg1: i32) -> (i32, i32, i32) {
    %c0_i32 = arith.constant 0 : i32
    %c0_i32_0 = arith.constant 0 : i32
    %c0_i32_1 = arith.constant 0 : i32
    %c0_i32_2 = arith.constant 0 : i32
    return %c0_i32, %c0_i32_0, %c0_i32_1 : i32, i32, i32
  }
  func.func @transform_4(%arg0: i32, %arg1: i32) -> (i32, i32, i32) {
    %c0_i32 = arith.constant 0 : i32
    %c0_i32_0 = arith.constant 0 : i32
    %c0_i32_1 = arith.constant 0 : i32
    %c0_i32_2 = arith.constant 0 : i32
    return %c0_i32, %c0_i32_0, %c0_i32_1 : i32, i32, i32
  }
  func.func @transform_5(%arg0: i32, %arg1: i32) -> (i32, i32, i32) {
    %c0_i32 = arith.constant 0 : i32
    %c0_i32_0 = arith.constant 0 : i32
    %c0_i32_1 = arith.constant 0 : i32
    %c0_i32_2 = arith.constant 0 : i32
    return %c0_i32, %c0_i32_0, %c0_i32_1 : i32, i32, i32
  }
  func.func @transform_6(%arg0: i32, %arg1: i32) -> (i32, i32, i32) {
    %c0_i32 = arith.constant 0 : i32
    %c0_i32_0 = arith.constant 0 : i32
    %c0_i32_1 = arith.constant 0 : i32
    return %arg0, %c0_i32, %c0_i32_0 : i32, i32, i32
  }
}

</mosaic_0001>

<llo_original>
// kernel: tpu_custom_call.1
$region0: #{tpu_custom_call.1}
  #allocation0 [shape = 'u32[]', space=smem, size = 0x4, offset = 0x4, fixed_abs, tag = 'smem constant byte address 0x4 - core index']
  #allocation1 [shape = 'u32[144,128]{1,0:T(1,128)}', space=vmem, size = 0x12000, scoped, tag = 'internal scratch']
  #allocation2 [shape = 'f32[2,4,1]{2,1,0:T(4,128)}', space=vmem, size = 0x1000, scoped, tag = 'scratch operand']
  #allocation3 [shape = 'f32[1,1,1]{2,1,0:T(1,128)S(1)}', space=vmem, size = 0x200, scoped, tag = 'scoped memory for tpu_custom_call.1']
  %s0 = inlined_call_operand.hbm [shape: f32[2,4,16], index: 0, kind: input, shape index: {}]
  %s1 = inlined_call_operand.vmem [shape: f32[1,4,4], index: 1, kind: input, shape index: {}]
  %s2 = inlined_call_operand.vmem [shape: f32[1,1,4], index: 2, kind: input, shape index: {}]
  %s3 = inlined_call_operand.<no memory space> [shape: f32[1,1,1], index: 3, kind: input, shape index: {}]
  %s4 = inlined_call_operand.vmem [shape: f32[1,4,4], index: 4, kind: input, shape index: {}]
  %s5 = inlined_call_operand.vmem [shape: f32[1,4,1], index: 5, kind: input, shape index: {}]
  %s6 = inlined_call_operand.vmem [shape: f32[2,4,1], index: 6, kind: output, shape index: {}]
  %s7 = sld [smem:[#allocation0]]
  $region46: #{tpu_custom_call.1} parent=0
    _
  %s9 = ssub.s32 1, %s7
  %s10 = scalar_select 0, %s9, %s7
  %v11 = vstv %s3
  %12 = vst [vmem:[#allocation3] sm:$0x1] %v11
  $region1: #{tpu_custom_call.1} parent=0
    #allocation4 [shape = 'u8[4096]{0}', space=vmem, size = 0x1000, scoped, tag = 'input window, operand 0, single buffered']
    #allocation5 [shape = 's32[1]{0}', space=sflag, size = 0x4, scoped, tag = 'scoped memory for tpu_custom_call.1']
    %13 = vsyncpa [#allocation5], 0
    // Predicated region
    $region2: #{tpu_custom_call.1} parent=1 // pred_check
      _
    $region3: #{tpu_custom_call.1} parent=1 // pred_check_branch
      %15 = sbr.rel (0) target = $region5
    $region4: #{tpu_custom_call.1} parent=1 // pred_region
      %s17 = ssub.s32 128, 128
      %18 = vsyncadd [#allocation5], %s17
      %s19 = sshll.u32 [#allocation4], 4
      %s20 = int_to_ptr.vmem [resolvable:$true] %s19
      %25 = dma.hbm_to_vmem [thread:$0]  %s0, 128, %s20, [#allocation5], 64, 64, 4
    $region5: #{tpu_custom_call.1} parent=1 // pred_fallthru
      _
    // Predicated region
    $region6: #{tpu_custom_call.1} parent=1 // pred_check
      _
    $region7: #{tpu_custom_call.1} parent=1 // pred_check_branch
      %27 = sbr.rel (0) target = $region9
    $region8: #{tpu_custom_call.1} parent=1 // pred_region
      _
    $region9: #{tpu_custom_call.1} parent=1 // pred_fallthru
      _
    // Predicated region
    $region10: #{tpu_custom_call.1} parent=1 // pred_check
      _
    $region11: #{tpu_custom_call.1} parent=1 // pred_check_branch
      %29 = sbr.rel (0) target = $region13
    $region12: #{tpu_custom_call.1} parent=1 // pred_region
      _
    $region13: #{tpu_custom_call.1} parent=1 // pred_fallthru
      _
    // Predicated region
    $region14: #{tpu_custom_call.1} parent=1 // pred_check
      _
    $region15: #{tpu_custom_call.1} parent=1 // pred_check_branch
      %31 = sbr.rel (0) target = $region17
    $region16: #{tpu_custom_call.1} parent=1 // pred_region
      _
    $region17: #{tpu_custom_call.1} parent=1 // pred_fallthru
      _
    // Predicated region
    $region18: #{tpu_custom_call.1} parent=1 // pred_check
      _
    $region19: #{tpu_custom_call.1} parent=1 // pred_check_branch
      %33 = sbr.rel (0) target = $region21
    $region20: #{tpu_custom_call.1} parent=1 // pred_region
      _
    $region21: #{tpu_custom_call.1} parent=1 // pred_fallthru
      _
    // Predicated region
    $region22: #{tpu_custom_call.1} parent=1 // pred_check
      _
    $region23: #{tpu_custom_call.1} parent=1 // pred_check_branch
      %35 = sbr.rel (0) target = $region25
    $region24: #{tpu_custom_call.1} parent=1 // pred_region
      _
    $region25: #{tpu_custom_call.1} parent=1 // pred_fallthru
      _
    // Predicated region
    $region26: #{tpu_custom_call.1} parent=1 // pred_check
      _
    $region27: #{tpu_custom_call.1} parent=1 // pred_check_branch
      %37 = sbr.rel (0) target = $region29
    $region28: #{tpu_custom_call.1} parent=1 // pred_region
      %38 = dma.done [#allocation5], 128
    $region29: #{tpu_custom_call.1} parent=1 // pred_fallthru
      _
    %p39 = scmp.eq.s32.totalorder 0, 0
    // Predicated region
    $region30: #{tpu_custom_call.1} parent=1 // pred_check
      %p40 = pneg %p39
    $region31: #{tpu_custom_call.1} parent=1 // pred_check_branch
      %42 = sbr.rel (%p40) target = $region33
    $region32: #{tpu_custom_call.1} parent=1 // pred_region
      %vm43 = vcmask 3072
      %44 = vst.msk [vmem:[#allocation2] sm:$0xf] %vm43, 0.0
      %45 = vst.msk [vmem:[#allocation2 + $0x4] sm:$0xf] %vm43, 0.0
    $region33: #{tpu_custom_call.1} parent=1 // pred_fallthru
      _
    %v46 = vld [vmem:[#allocation4] sm:$0xf]
    %v47 = vld [vmem:[#allocation4 + $0x4] sm:$0xf]
    %v48 = vld [vmem:[#allocation2] sm:$0xf]
    %v49 = vld [vmem:[#allocation2 + $0x4] sm:$0xf]
    %vm50 = vcmask 125952
    %v51 = vsel %vm50, %v46, 0.0
    %52 = vadd.xlane.f32.xlu0 %v51
    %v53 = vpop.xlane.xlu0 %52
    %v54 = vsel %vm50, %v47, 0.0
    %55 = vadd.xlane.f32.xlu0 %v54
    %v56 = vpop.xlane.xlu0 %55
    %v57 = vadd.f32 %v48, %v53
    %v58 = vadd.f32 %v49, %v56
    %vm59 = vcmask 3072
    %60 = vst.msk [vmem:[#allocation2] sm:$0xf] %vm59, %v57
    %61 = vst.msk [vmem:[#allocation2 + $0x4] sm:$0xf] %vm59, %v58
    // Predicated region
    $region34: #{tpu_custom_call.1} parent=1 // pred_check
      %p62 = pneg %p39
    $region35: #{tpu_custom_call.1} parent=1 // pred_check_branch
      %64 = sbr.rel (%p62) target = $region37
    $region36: #{tpu_custom_call.1} parent=1 // pred_region
      %v65 = vld [vmem:[#allocation2] sm:$0xf]
      %v66 = vld [vmem:[#allocation2 + $0x4] sm:$0xf]
      %v67 = vrcp.pop 16.0
      %v68 = vmul.f32 %v65, %v67
      %v69 = vmul.f32 %v66, %v67
      %v70 = vld [vmem:[%s1] sm:$0xf]
      %72 = vset.pattern.permute.xlu0 0
      %73 = vperm.xlu0 %72, %v68
      %v74 = vpop.permute.xlu0 %73
      %77 = vset.pattern.permute.xlu0 0
      %78 = vperm.xlu0 %77, %v69
      %v79 = vpop.permute.xlu0 %78
      %v81 = vmul.f32 %v74, %v70
      %v82 = vmul.f32 %v79, %v70
      %vm83 = vcmask 27648
      %v84 = vsel %vm83, %v81, 0.0
      %v85 = vrot.slane %v84, 4
      %v86 = vadd.f32 %v84, %v85
      %v87 = vrot.slane %v86, 2
      %v88 = vadd.f32 %v86, %v87
      %v89 = vrot.slane %v88, 1
      %v90 = vadd.f32 %v88, %v89
      %v91 = vsel %vm83, %v82, 0.0
      %v92 = vrot.slane %v91, 4
      %v93 = vadd.f32 %v91, %v92
      %v94 = vrot.slane %v93, 2
      %v95 = vadd.f32 %v93, %v94
      %v96 = vrot.slane %v95, 1
      %v97 = vadd.f32 %v95, %v96
      %v98 = vld [vmem:[%s2] sm:$0x1]
      %v99 = vadd.f32 %v90, %v98
      %v100 = vadd.f32 %v97, %v98
      %v101 = vld [vmem:[#allocation3] sm:$0x1]
      %vm102 = vcmp.gt.f32.partialorder %v99, 0.0
      %vm103 = vcmp.gt.f32.partialorder %v100, 0.0
      %105 = vset.pattern.permute.xlu0 0
      %106 = vperm.xlu0 %105, %v101
      %v107 = vpop.permute.xlu0 %106
      %v109 = vlaneseq
      %v110 = vshrl.u32 %v109, 7
      %v111 = vsub.s32 0, %v110
      %v112 = vrot.slane %v107, %v111
      %v113 = vmul.f32 %v112, %v99
      %v114 = vmul.f32 %v112, %v100
      %v115 = vsel %vm102, %v99, %v113
      %v116 = vsel %vm103, %v100, %v114
      %v117 = vld [vmem:[%s4] sm:$0xf]
      %v118 = vlaneseq
      %v119 = vshrl.u32 %v118, 7
      %v120 = vsub.s32 0, %v119
      %v121 = vrot.slane %v115, %v120
      %v122 = vlaneseq
      %v123 = vshrl.u32 %v122, 7
      %v124 = vsub.s32 0, %v123
      %v125 = vrot.slane %v116, %v124
      %v126 = vmul.f32 %v121, %v117
      %v127 = vmul.f32 %v125, %v117
      %v128 = vsel %vm83, %v126, 0.0
      %129 = vadd.xlane.f32.xlu0 %v128
      %v130 = vpop.xlane.xlu0 %129
      %v131 = vsel %vm83, %v127, 0.0
      %132 = vadd.xlane.f32.xlu0 %v131
      %v133 = vpop.xlane.xlu0 %132
      %v134 = vld [vmem:[%s5] sm:$0xf]
      %v135 = vadd.f32 %v130, %v134
      %v136 = vadd.f32 %v133, %v134
      %v137 = vxor.u32 %v135, 2147483648
      %v138 = vxor.u32 %v136, 2147483648
      %v139 = vmul.f32 %v137, 1.442695
      %v140 = vpow.pop %v139
      %v141 = vmul.f32 %v138, 1.442695
      %v142 = vpow.pop %v141
      %v143 = vadd.f32 %v140, 1.0
      %v144 = vadd.f32 %v142, 1.0
      %v145 = vrcp.pop %v143
      %v146 = vmul.f32 1.0, %v145
      %v147 = vrcp.pop %v144
      %v148 = vmul.f32 1.0, %v147
      %149 = vst.msk [vmem:[%s6] sm:$0xf] %vm59, %v146
      %150 = vst.msk [vmem:[%s6 + $0x4] sm:$0xf] %vm59, %v148
    $region37: #{tpu_custom_call.1} parent=1 // pred_fallthru
      _
    // Predicated region
    $region38: #{tpu_custom_call.1} parent=1 // pred_check
      _
    $region39: #{tpu_custom_call.1} parent=1 // pred_check_branch
      %152 = sbr.rel (0) target = $region41
    $region40: #{tpu_custom_call.1} parent=1 // pred_region
      _
    $region41: #{tpu_custom_call.1} parent=1 // pred_fallthru
      _
    // Predicated region
    $region42: #{tpu_custom_call.1} parent=1 // pred_check
      _
    $region43: #{tpu_custom_call.1} parent=1 // pred_check_branch
      %154 = sbr.rel (0) target = $region45
    $region44: #{tpu_custom_call.1} parent=1 // pred_region
      _
    $region45: #{tpu_custom_call.1} parent=1 // pred_fallthru
      _
    %155 = vsyncpa [#allocation5], 1

</llo_original>
